<compile_context>
chip_gen: v7x
topology: tpu7x:2x2x1
jax: 0.10.0
libtpu: 0.0.40
codegen_flags: <defaults>
</compile_context>

<pallas_src>
import functools

import jax
import jax.numpy as jnp
from jax.experimental import pallas as pl
from jax.experimental.pallas import tpu as pltpu


def _round_up(n, m):
    return ((n + m - 1) // m) * m


def _policy_kernel(layer_meta, x_ref, p_ref, out_ref):
    """layer_meta: tuple of (w_row, b_row, in_p, out_p) static Python ints.

    x_ref:  (TB, obs_p)      batch tile (zero-padded features)
    p_ref:  (rows, slab_w)   packed parameter slab (VMEM-resident)
    out_ref:(TB, act_p)      lane-dense output tile
    """
    out = x_ref[...]
    n_layers = len(layer_meta)
    for idx, (w_row, b_row, in_p, out_p) in enumerate(layer_meta):
        # Static, (8,128)-tile-aligned slices of the parameter slab.
        w = p_ref[w_row:w_row + in_p, :out_p]
        b = p_ref[b_row:b_row + 1, :out_p]
        out = jnp.dot(out, w, preferred_element_type=jnp.float32) + b
        if idx < n_layers - 1:
            out = jnp.tanh(out)
    out_ref[...] = out


def _pack_params(obsnorm_mean, obsnorm_std, hidden_ws, hidden_bs, out_w, out_b):
    """Fold normalization into layer 0 and pack all params into one padded slab."""
    ws = list(hidden_ws) + [out_w]
    bs = [jnp.reshape(b, (1, -1)) for b in (list(hidden_bs) + [out_b])]

    mean = jnp.reshape(obsnorm_mean, (1, -1)).astype(jnp.float32)
    inv_std = 1.0 / (jnp.reshape(obsnorm_std, (1, -1)).astype(jnp.float32) + 1e-6)

    # Fold: ((x - mean)*inv) @ W0 + b0 == x @ (diag(inv) @ W0) + (b0 - (mean*inv) @ W0)
    w0 = ws[0].astype(jnp.float32)
    bs[0] = bs[0].astype(jnp.float32) - (mean * inv_std) @ w0
    ws[0] = inv_std.reshape(-1, 1) * w0

    dims = [ws[0].shape[0]] + [w.shape[1] for w in ws]
    dims_p = [_round_up(d, 128) for d in dims]
    slab_w = max(dims_p[1:])

    blocks, meta = [], []
    row = 0
    for i, (w, b) in enumerate(zip(ws, bs)):
        in_d, out_d = w.shape
        in_p, out_p = dims_p[i], dims_p[i + 1]
        w_pad = jnp.zeros((in_p, slab_w), jnp.float32).at[:in_d, :out_d].set(
            w.astype(jnp.float32))
        b_pad = jnp.zeros((8, slab_w), jnp.float32).at[0, :out_d].set(
            b[0].astype(jnp.float32))
        blocks += [w_pad, b_pad]
        meta.append((row, row + in_p, in_p, out_p))
        row += in_p + 8

    slab = jnp.concatenate(blocks, axis=0)
    obs_p, act_p, act_dim = dims_p[0], dims_p[-1], dims[-1]
    return slab, tuple(meta), obs_p, act_p, act_dim


def loaded_gaussian_policy_forward(x, obsnorm_mean, obsnorm_std,
                                   hidden_ws, hidden_bs, out_w, out_b,
                                   *, block_b=256):
    """Full policy forward pass in one Pallas kernel, tiled over the batch."""
    slab, meta, obs_p, act_p, act_dim = _pack_params(
        obsnorm_mean, obsnorm_std, hidden_ws, hidden_bs, out_w, out_b)

    B, obs_dim = x.shape
    tb = min(block_b, _round_up(B, 8))          # batch tile, multiple of 8
    b_pad = _round_up(B, tb)

    # Zero-pad batch (sublane) and features (lane) so every tile is dense.
    x_pad = jnp.zeros((b_pad, obs_p), jnp.float32).at[:B, :obs_dim].set(
        x.astype(jnp.float32))

    grid = (pl.cdiv(b_pad, tb),)
    kernel = functools.partial(_policy_kernel, meta)

    out = pl.pallas_call(
        kernel,
        out_shape=jax.ShapeDtypeStruct((b_pad, act_p), jnp.float32),
        grid=grid,
        in_specs=[
            pl.BlockSpec((tb, obs_p), lambda i: (i, 0)),      # x: tiled on batch
            pl.BlockSpec(slab.shape, lambda i: (0, 0)),       # params: VMEM-resident
        ],
        out_specs=pl.BlockSpec((tb, act_p), lambda i: (i, 0)),
        compiler_params=pltpu.CompilerParams(
            dimension_semantics=("parallel",)),               # v7x dual-TC sharding
    )(x_pad, slab)

    return out[:B, :act_dim]


def _reference_forward(x, obsnorm_mean, obsnorm_std, hidden_ws, hidden_bs, out_w, out_b):
    out = (x - obsnorm_mean) / (obsnorm_std + 1e-6)
    for w, b in zip(hidden_ws, hidden_bs):
        out = jnp.tanh(out @ w + b)
    return out @ out_w + out_b


if __name__ == "__main__":
    # Small shapes consistent with the module: a 2-hidden-layer Gaussian policy MLP.
    batch = 48           # not a multiple of the batch tile -> exercises padding
    obs_dim = 16
    hidden_dim = 32
    act_dim = 8
    n_hidden_layers = 2

    key = jax.random.PRNGKey(0)
    keys = jax.random.split(key, 3 + 2 * n_hidden_layers + 2)

    x = jax.random.normal(keys[0], (batch, obs_dim), dtype=jnp.float32)
    obsnorm_mean = jax.random.normal(keys[1], (1, obs_dim), dtype=jnp.float32)
    obsnorm_std = jnp.abs(jax.random.normal(keys[2], (1, obs_dim), dtype=jnp.float32)) + 0.5

    hidden_ws, hidden_bs = [], []
    in_dim = obs_dim
    k = 3
    for _ in range(n_hidden_layers):
        hidden_ws.append(
            0.1 * jax.random.normal(keys[k], (in_dim, hidden_dim), dtype=jnp.float32))
        hidden_bs.append(
            0.1 * jax.random.normal(keys[k + 1], (1, hidden_dim), dtype=jnp.float32))
        in_dim = hidden_dim
        k += 2

    out_w = 0.1 * jax.random.normal(keys[k], (in_dim, act_dim), dtype=jnp.float32)
    out_b = 0.1 * jax.random.normal(keys[k + 1], (1, act_dim), dtype=jnp.float32)

    # block_b=32 -> batch pads 48->64 and the grid has 2 steps (tests tiling).
    out = loaded_gaussian_policy_forward(
        x, obsnorm_mean, obsnorm_std, hidden_ws, hidden_bs, out_w, out_b,
        block_b=32)
    jax.block_until_ready(out)

    ref = _reference_forward(
        x, obsnorm_mean, obsnorm_std, hidden_ws, hidden_bs, out_w, out_b)
    assert out.shape == (batch, act_dim)
    # Slightly looser tolerance: normalization is folded into layer 0 (f32-rounding
    # level reordering), numerically equivalent otherwise.
    assert jnp.allclose(out, ref, atol=1e-4, rtol=1e-4), float(jnp.max(jnp.abs(out - ref)))

    # TODO(synk): the original 'lrelu' branch returns an nn.LeakyReLU module
    # (a bug in the reference PyTorch code), so only the 'tanh' activation path
    # is implemented here.
    print("KERNEL_OK")
</pallas_src>

<mosaic_0001>
module attributes {stable_mosaic.version = 11 : i64} {
  func.func @_policy_kernel(%arg0: i32, %arg1: memref<32x128xf32, #tpu.memory_space<vmem>>, %arg2: memref<408x128xf32, #tpu.memory_space<vmem>>, %arg3: memref<32x128xf32, #tpu.memory_space<vmem>>) attributes {dimension_semantics = [#tpu.dimension_semantics<parallel>], iteration_bounds = array<i64: 2>, scalar_prefetch = 0 : i64, scratch_operands = 0 : i64, tpu.core_type = #tpu.core_type<tc>, window_params = [{transform_indices = @transform_0, window_bounds = array<i64: 32, 128>}, {pipeline_mode = #tpu.pipeline_mode<synchronous>, transform_indices = @transform_1, window_bounds = array<i64: 408, 128>}, {transform_indices = @transform_2, window_bounds = array<i64: 32, 128>}]} {
    %c0 = arith.constant 0 : index
    %c0_0 = arith.constant 0 : index
    %0 = vector.load %arg1[%c0, %c0_0] : memref<32x128xf32, #tpu.memory_space<vmem>>, vector<32x128xf32>
    %c0_1 = arith.constant 0 : index
    %c0_2 = arith.constant 0 : index
    %1 = vector.load %arg2[%c0_1, %c0_2] : memref<408x128xf32, #tpu.memory_space<vmem>>, vector<128x128xf32>
    %c128 = arith.constant 128 : index
    %c0_3 = arith.constant 0 : index
    %2 = vector.load %arg2[%c128, %c0_3] : memref<408x128xf32, #tpu.memory_space<vmem>>, vector<1x128xf32>
    %cst = arith.constant dense<0.000000e+00> : vector<32x128xf32>
    %3 = tpu.matmul %0, %1, %cst {dimension_numbers = #tpu.dot_dimension_numbers<[1], [0], [0], [1], [0, 0, 1, 1], [], []>} : vector<32x128xf32>, vector<128x128xf32>, vector<32x128xf32> -> vector<32x128xf32>
    %4 = vector.broadcast %2 : vector<1x128xf32> to vector<32x128xf32>
    %5 = arith.addf %3, %4 : vector<32x128xf32>
    %6 = math.tanh %5 : vector<32x128xf32>
    %c136 = arith.constant 136 : index
    %c0_4 = arith.constant 0 : index
    %7 = vector.load %arg2[%c136, %c0_4] : memref<408x128xf32, #tpu.memory_space<vmem>>, vector<128x128xf32>
    %c264 = arith.constant 264 : index
    %c0_5 = arith.constant 0 : index
    %8 = vector.load %arg2[%c264, %c0_5] : memref<408x128xf32, #tpu.memory_space<vmem>>, vector<1x128xf32>
    %cst_6 = arith.constant dense<0.000000e+00> : vector<32x128xf32>
    %9 = tpu.matmul %6, %7, %cst_6 {dimension_numbers = #tpu.dot_dimension_numbers<[1], [0], [0], [1], [0, 0, 1, 1], [], []>} : vector<32x128xf32>, vector<128x128xf32>, vector<32x128xf32> -> vector<32x128xf32>
    %10 = vector.broadcast %8 : vector<1x128xf32> to vector<32x128xf32>
    %11 = arith.addf %9, %10 : vector<32x128xf32>
    %12 = math.tanh %11 : vector<32x128xf32>
    %c272 = arith.constant 272 : index
    %c0_7 = arith.constant 0 : index
    %13 = vector.load %arg2[%c272, %c0_7] : memref<408x128xf32, #tpu.memory_space<vmem>>, vector<128x128xf32>
    %c400 = arith.constant 400 : index
    %c0_8 = arith.constant 0 : index
    %14 = vector.load %arg2[%c400, %c0_8] : memref<408x128xf32, #tpu.memory_space<vmem>>, vector<1x128xf32>
    %cst_9 = arith.constant dense<0.000000e+00> : vector<32x128xf32>
    %15 = tpu.matmul %12, %13, %cst_9 {dimension_numbers = #tpu.dot_dimension_numbers<[1], [0], [0], [1], [0, 0, 1, 1], [], []>} : vector<32x128xf32>, vector<128x128xf32>, vector<32x128xf32> -> vector<32x128xf32>
    %16 = vector.broadcast %14 : vector<1x128xf32> to vector<32x128xf32>
    %17 = arith.addf %15, %16 : vector<32x128xf32>
    %c0_10 = arith.constant 0 : index
    %c0_11 = arith.constant 0 : index
    %18 = vector.load %arg3[%c0_10, %c0_11] : memref<32x128xf32, #tpu.memory_space<vmem>>, vector<32x128xf32>
    tpu.vector_store %arg3[%c0_10, %c0_11], %17 {strides = array<i32>} : memref<32x128xf32, #tpu.memory_space<vmem>>, vector<32x128xf32>,
    return
  }
  func.func @transform_0(%arg0: i32) -> (i32, i32) {
    %c0_i32 = arith.constant 0 : i32
    %c0_i32_0 = arith.constant 0 : i32
    return %arg0, %c0_i32 : i32, i32
  }
  func.func @transform_1(%arg0: i32) -> (i32, i32) {
    %c0_i32 = arith.constant 0 : i32
    %c0_i32_0 = arith.constant 0 : i32
    %c0_i32_1 = arith.constant 0 : i32
    return %c0_i32, %c0_i32_0 : i32, i32
  }
  func.func @transform_2(%arg0: i32) -> (i32, i32) {
    %c0_i32 = arith.constant 0 : i32
    %c0_i32_0 = arith.constant 0 : i32
    return %arg0, %c0_i32 : i32, i32
  }
}

</mosaic_0001>

<llo_original>
// kernel: tpu_custom_call.1
$region0: #{tpu_custom_call.1}
  #allocation0 [shape = 'u32[]', space=smem, size = 0x4, offset = 0x4, fixed_abs, tag = 'smem constant byte address 0x4 - core index']
  #allocation1 [shape = 'u32[144,128]{1,0:T(1,128)}', space=vmem, size = 0x12000, scoped, tag = 'internal scratch']
  %s0 = inlined_call_operand.hbm [shape: f32[64,128], index: 0, kind: input, shape index: {}]
  %s1 = inlined_call_operand.hbm [shape: f32[408,128], index: 1, kind: input, shape index: {}]
  %s2 = inlined_call_operand.hbm [shape: f32[64,128], index: 2, kind: output, shape index: {}]
  %s3 = sld [smem:[#allocation0]]
  $region49: #{tpu_custom_call.1} parent=0
    _
  %s5 = ssub.s32 1, %s3
  %s6 = scalar_select 0, %s5, %s3
  $region1: #{tpu_custom_call.1} parent=0
    #allocation2 [shape = 'u8[32768]{0}', space=vmem, size = 0x8000, scoped, tag = 'input window, operand 0']
    #allocation3 [shape = 's32[2]{0}', space=sflag, size = 0x8, scoped, tag = 'scoped memory for tpu_custom_call.1']
    #allocation4 [shape = 's32[2]{0}', space=sflag, size = 0x8, scoped, tag = 'scoped memory for tpu_custom_call.1']
    #allocation5 [shape = 'u8[208896]{0}', space=vmem, size = 0x33000, scoped, tag = 'input window, operand 1, single buffered']
    #allocation6 [shape = 's32[1]{0}', space=sflag, size = 0x4, scoped, tag = 'scoped memory for tpu_custom_call.1']
    #allocation7 [shape = 'u8[32768]{0}', space=vmem, size = 0x8000, scoped, tag = 'output window, operand 0']
    %7 = vsyncpa [#allocation3], 0
    %s8 = scalar_lea.sflag [#allocation3], 1
    %9 = vsyncpa %s8, 0
    %10 = vsyncpa [#allocation6], 0
    %11 = vsyncpa [#allocation4], 0
    %s12 = scalar_lea.sflag [#allocation4], 1
    %13 = vsyncpa %s12, 0
    loop: start=0, step=1, limit=4
    $region2: #{tpu_custom_call.1} parent=1 // loop_pre_header
      _
    $region3: #{tpu_custom_call.1} parent=1 // loop_header
      %s15 = sphi 0, %s19
      %p16 = scmp.ge.s32.totalorder %s15, 4
      %s25 = sphi 0, %s27
      %s28 = sphi 0, %s25
      %s29 = sphi 0, %s28
      %s45 = sphi 0, %s29
      %s49 = sphi 0, %s49
      %s51 = sphi 0, %s49
      %s52 = sphi 0, %s51
      %s66 = sphi 0, %s52
      %s72 = sphi 0, %s74
      %s75 = sphi 0, %s72
      %s76 = sphi 0, %s75
      %s92 = sphi 0, %s76
    $region4: #{tpu_custom_call.1} parent=1 // loop_header_branch
      %18 = sbr.rel (%p16) target = $region8
    $region5: #{tpu_custom_call.1} parent=1 // loop_body
      %s20 = ssub.s32 %s15, 1
      %s21 = ssub.s32 %s15, 2
      %s22 = sadd.s32 %s15, 1
      %s23 = ssub.s32 %s15, %s22
      %p24 = scmp.eq.s32.totalorder %s23, 0
      %s26 = sadd.s32 %s25, 1
      %s27 = scalar_select %p24, %s25, %s26
      %p30 = pneg %p24
      %p31 = scmp.eq.s32.totalorder %s15, 1
      %p32 = por %p30, %p31
      %p33 = scmp.ne.s32.totalorder %s25, %s28
      %p34 = scmp.eq.s32.totalorder %s15, 0
      %p35 = por %p33, %p34
      %p36 = scmp.ne.s32.totalorder %s25, %s28
      %p37 = scmp.eq.s32.totalorder %s20, 1
      %p38 = por %p36, %p37
      %p39 = scmp.ne.s32.totalorder %s28, %s29
      %p40 = scmp.eq.s32.totalorder %s20, 0
      %p41 = por %p39, %p40
      %p42 = scmp.ne.s32.totalorder %s28, %s29
      %p43 = scmp.eq.s32.totalorder %s21, 1
      %p44 = por %p42, %p43
      %p46 = scmp.ne.s32.totalorder %s29, %s45
      %p47 = scmp.eq.s32.totalorder %s21, 0
      %p48 = por %p46, %p47
      %s50 = sadd.s32 %s49, 1
      %p53 = scmp.eq.s32.totalorder %s15, 1
      %p54 = scmp.ne.s32.totalorder %s49, %s51
      %p55 = scmp.eq.s32.totalorder %s15, 0
      %p56 = por %p54, %p55
      %p57 = scmp.ne.s32.totalorder %s49, %s51
      %p58 = scmp.eq.s32.totalorder %s20, 1
      %p59 = por %p57, %p58
      %p60 = scmp.ne.s32.totalorder %s51, %s52
      %p61 = scmp.eq.s32.totalorder %s20, 0
      %p62 = por %p60, %p61
      %p63 = scmp.ne.s32.totalorder %s51, %s52
      %p64 = scmp.eq.s32.totalorder %s21, 1
      %p65 = por %p63, %p64
      %p67 = scmp.ne.s32.totalorder %s52, %s66
      %p68 = scmp.eq.s32.totalorder %s21, 0
      %p69 = por %p67, %p68
      %s70 = ssub.s32 %s15, %s22
      %p71 = scmp.eq.s32.totalorder %s70, 0
      %s73 = sadd.s32 %s72, 1
      %s74 = scalar_select %p71, %s72, %s73
      %p77 = pneg %p71
      %p78 = scmp.eq.s32.totalorder %s15, 1
      %p79 = por %p77, %p78
      %p80 = scmp.ne.s32.totalorder %s72, %s75
      %p81 = scmp.eq.s32.totalorder %s15, 0
      %p82 = por %p80, %p81
      %p83 = scmp.ne.s32.totalorder %s72, %s75
      %p84 = scmp.eq.s32.totalorder %s20, 1
      %p85 = por %p83, %p84
      %p86 = scmp.ne.s32.totalorder %s75, %s76
      %p87 = scmp.eq.s32.totalorder %s20, 0
      %p88 = por %p86, %p87
      %p89 = scmp.ne.s32.totalorder %s75, %s76
      %p90 = scmp.eq.s32.totalorder %s21, 1
      %p91 = por %p89, %p90
      %p93 = scmp.ne.s32.totalorder %s76, %s92
      %p94 = scmp.eq.s32.totalorder %s21, 0
      %p95 = por %p93, %p94
      %p96 = scmp.le.s32.totalorder 1, %s15
      %p97 = scmp.lt.s32.totalorder %s15, 3
      %p98 = pnand %p96, %p97
      %p99 = pneg %p98
      // Predicated region
      $region9: #{tpu_custom_call.1} parent=5 // pred_check
        _
      $region10: #{tpu_custom_call.1} parent=5 // pred_check_branch
        %101 = sbr.rel (%p98) target = $region12
      $region11: #{tpu_custom_call.1} parent=5 // pred_region
        %s102 = ssub.s32 %s15, 1
        // Predicated region
        $region13: #{tpu_custom_call.1} parent=11 // pred_check
          %p103 = pneg %p62
        $region14: #{tpu_custom_call.1} parent=11 // pred_check_branch
          %105 = sbr.rel (%p103) target = $region16
        $region15: #{tpu_custom_call.1} parent=11 // pred_region
          %s107 = ssub.s32 6528, 6528
          %108 = vsyncadd [#allocation6], %s107
          %s109 = sshll.u32 [#allocation5], 4
          %s110 = int_to_ptr.vmem [resolvable:$true] %s109
          %115 = dma.hbm_to_vmem [thread:$0]  %s1, 6528, %s110, [#allocation6], 128, 128, 8
        $region16: #{tpu_custom_call.1} parent=11 // pred_fallthru
          _
      $region12: #{tpu_custom_call.1} parent=5 // pred_fallthru
        _
      %p116 = scmp.lt.s32.totalorder %s15, 2
      // Predicated region
      $region17: #{tpu_custom_call.1} parent=5 // pred_check
        %p117 = pneg %p116
      $region18: #{tpu_custom_call.1} parent=5 // pred_check_branch
        %119 = sbr.rel (%p117) target = $region20
      $region19: #{tpu_custom_call.1} parent=5 // pred_region
        // Predicated region
        $region21: #{tpu_custom_call.1} parent=19 // pred_check
          %p120 = pneg %p35
        $region22: #{tpu_custom_call.1} parent=19 // pred_check_branch
          %122 = sbr.rel (%p120) target = $region24
        $region23: #{tpu_custom_call.1} parent=19 // pred_region
          %s123 = sand.u32 %s25, 1
          %s124 = scalar_lea.sflag [#allocation3], %s123
          %s125 = sand.u32 %s25, 1
          %s126 = smul.addr %s125, 32
          %s127 = scalar_lea.vmem [#allocation2], %s126
          %s128 = smul.u32 4, %s15
          %s130 = ssub.s32 512, 512
          %131 = vsyncadd %s124, %s130
          %s132 = smul.addr %s128, 128
          %s133 = scalar_lea.hbm %s0, %s132
          %s134 = sshll.u32 %s127, 4
          %s135 = int_to_ptr.vmem [resolvable:$true] %s134
          %140 = dma.hbm_to_vmem [thread:$0]  %s133, 512, %s135, %s124, 128, 128, 8
        $region24: #{tpu_custom_call.1} parent=19 // pred_fallthru
          _
      $region20: #{tpu_custom_call.1} parent=5 // pred_fallthru
        _
      %p141 = scmp.le.s32.totalorder 1, %s15
      %p142 = scmp.lt.s32.totalorder %s15, 3
      %p143 = pnand %p141, %p142
      %p144 = pneg %p143
      // Predicated region
      $region25: #{tpu_custom_call.1} parent=5 // pred_check
        _
      $region26: #{tpu_custom_call.1} parent=5 // pred_check_branch
        %146 = sbr.rel (%p143) target = $region28
      $region27: #{tpu_custom_call.1} parent=5 // pred_region
        %s147 = ssub.s32 %s15, 1
        %s148 = sand.u32 %s28, 1
        %s149 = scalar_lea.sflag [#allocation3], %s148
        %s150 = sand.u32 %s28, 1
        %s151 = smul.addr %s150, 32
        %s152 = scalar_lea.vmem [#allocation2], %s151
        // Predicated region
        $region29: #{tpu_custom_call.1} parent=27 // pred_check
          %p153 = pneg %p41
        $region30: #{tpu_custom_call.1} parent=27 // pred_check_branch
          %155 = sbr.rel (%p153) target = $region32
        $region31: #{tpu_custom_call.1} parent=27 // pred_region
          %156 = dma.done %s149, 512
        $region32: #{tpu_custom_call.1} parent=27 // pred_fallthru
          _
        // Predicated region
        $region33: #{tpu_custom_call.1} parent=27 // pred_check
          %p157 = pneg %p62
        $region34: #{tpu_custom_call.1} parent=27 // pred_check_branch
          %159 = sbr.rel (%p157) target = $region36
        $region35: #{tpu_custom_call.1} parent=27 // pred_region
          %160 = dma.done [#allocation6], 6528
        $region36: #{tpu_custom_call.1} parent=27 // pred_fallthru
          _
        %s161 = sand.u32 %s28, 1
        %s162 = scalar_lea.sflag [#allocation3], %s161
        %s163 = sand.u32 %s28, 1
        %s164 = smul.addr %s163, 32
        %s165 = scalar_lea.vmem [#allocation2], %s164
        %p166 = pneg %p41
        %p167 = pneg %p38
        %p168 = pneg %p62
        %p169 = pneg %p59
        %p170 = pneg %p88
        %p171 = pneg %p85
        %s172 = sand.u32 %s75, 1
        %s173 = scalar_lea.sflag [#allocation4], %s172
        %s174 = sand.u32 %s75, 1
        %s175 = smul.addr %s174, 32
        %s176 = scalar_lea.vmem [#allocation7], %s175
        %s177 = smul.u32 4, %s20
        %s178 = smul.u32 4, %s20
        %v179 = vld [vmem:[%s152] sm:$0xff]
        %v180 = vld [vmem:[%s152 + $0x8] sm:$0xff]
        %v181 = vld [vmem:[%s152 + $0x10] sm:$0xff]
        %v182 = vld [vmem:[%s152 + $0x18] sm:$0xff]
        %v183 = vld [vmem:[#allocation5] sm:$0xff]
        %v184 = vld [vmem:[#allocation5 + $0x8] sm:$0xff]
        %v185 = vld [vmem:[#allocation5 + $0x10] sm:$0xff]
        %v186 = vld [vmem:[#allocation5 + $0x18] sm:$0xff]
        %v187 = vld [vmem:[#allocation5 + $0x20] sm:$0xff]
        %v188 = vld [vmem:[#allocation5 + $0x28] sm:$0xff]
        %v189 = vld [vmem:[#allocation5 + $0x30] sm:$0xff]
        %v190 = vld [vmem:[#allocation5 + $0x38] sm:$0xff]
        %v191 = vld [vmem:[#allocation5 + $0x40] sm:$0xff]
        %v192 = vld [vmem:[#allocation5 + $0x48] sm:$0xff]
        %v193 = vld [vmem:[#allocation5 + $0x50] sm:$0xff]
        %v194 = vld [vmem:[#allocation5 + $0x58] sm:$0xff]
        %v195 = vld [vmem:[#allocation5 + $0x60] sm:$0xff]
        %v196 = vld [vmem:[#allocation5 + $0x68] sm:$0xff]
        %v197 = vld [vmem:[#allocation5 + $0x70] sm:$0xff]
        %v198 = vld [vmem:[#allocation5 + $0x78] sm:$0xff]
        %v199 = vld [vmem:[#allocation5 + $0x80] sm:$0x1]
        %v200 = vlaneseq
        %v201 = vshrl.u32 %v200, 7
        %v202 = vsub.s32 0, %v201
        %v203 = vrot.slane %v199, %v202
        %204 = vmatprep.subr.mxu0 0.0
        %205 = vmatpush1.msra.mxu0 %v183
        %206 = vmatprep.subr.mxu0 0.0
        %207 = vmatpush1.msra.mxu0 %v184
        %208 = vmatprep.subr.mxu0 0.0
        %209 = vmatpush1.msra.mxu0 %v185
        %210 = vmatprep.subr.mxu0 0.0
        %211 = vmatpush1.msra.mxu0 %v186
        %212 = vmatprep.subr.mxu0 0.0
        %213 = vmatpush1.msra.mxu0 %v187
        %214 = vmatprep.subr.mxu0 0.0
        %215 = vmatpush1.msra.mxu0 %v188
        %216 = vmatprep.subr.mxu0 0.0
        %217 = vmatpush1.msra.mxu0 %v189
        %218 = vmatprep.subr.mxu0 0.0
        %219 = vmatpush1.msra.mxu0 %v190
        %220 = vmatprep.subr.mxu0 0.0
        %221 = vmatpush1.msra.mxu0 %v191
        %222 = vmatprep.subr.mxu0 0.0
        %223 = vmatpush1.msra.mxu0 %v192
        %224 = vmatprep.subr.mxu0 0.0
        %225 = vmatpush1.msra.mxu0 %v193
        %226 = vmatprep.subr.mxu0 0.0
        %227 = vmatpush1.msra.mxu0 %v194
        %228 = vmatprep.subr.mxu0 0.0
        %229 = vmatpush1.msra.mxu0 %v195
        %230 = vmatprep.subr.mxu0 0.0
        %231 = vmatpush1.msra.mxu0 %v196
        %232 = vmatprep.subr.mxu0 0.0
        %233 = vmatpush1.msra.mxu0 %v197
        %234 = vmatprep.subr.mxu0 0.0
        %235 = vmatpush1.msra.mxu0 %v198
        %236 = vmatprep.subr.mxu0 0.0
        %237 = vmatpush1.msra.mxu0 0.0
        %238 = vmatprep.subr.mxu0 0.0
        %239 = vmatpush1.msra.mxu0 0.0
        %240 = vmatprep.subr.mxu0 0.0
        %241 = vmatpush1.msra.mxu0 0.0
        %242 = vmatprep.subr.mxu0 0.0
        %243 = vmatpush1.msra.mxu0 0.0
        %244 = vmatprep.subr.mxu0 0.0
        %245 = vmatpush1.msra.mxu0 0.0
        %246 = vmatprep.subr.mxu0 0.0
        %247 = vmatpush1.msra.mxu0 0.0
        %248 = vmatprep.subr.mxu0 0.0
        %249 = vmatpush1.msra.mxu0 0.0
        %250 = vmatprep.subr.mxu0 0.0
        %251 = vmatpush1.msra.mxu0 0.0
        %252 = vmatprep.subr.mxu0 0.0
        %253 = vmatpush1.msra.mxu0 0.0
        %254 = vmatprep.subr.mxu0 0.0
        %255 = vmatpush1.msra.mxu0 0.0
        %256 = vmatprep.subr.mxu0 0.0
        %257 = vmatpush1.msra.mxu0 0.0
        %258 = vmatprep.subr.mxu0 0.0
        %259 = vmatpush1.msra.mxu0 0.0
        %260 = vmatprep.subr.mxu0 0.0
        %261 = vmatpush1.msra.mxu0 0.0
        %262 = vmatprep.subr.mxu0 0.0
        %263 = vmatpush1.msra.mxu0 0.0
        %264 = vmatprep.subr.mxu0 0.0
        %265 = vmatpush1.msra.mxu0 0.0
        %266 = vmatprep.subr.mxu0 0.0
        %267 = vmatpush1.msra.mxu0 0.0
        %268 = vmatprep.mubr.f32.mxu0 0.0
        %269 = vmatmul.mubr.f32.gmra.mrb[0].mxu0 %v179
        %v270 = vpop.f32.mrb[0].mxu0
        %v271 = vadd.f32 %v203, %v270
        %v272 = vpop.f32.mrb[0].mxu0
        %273 = vmatprep.mubr.f32.mxu0 0.0
        %274 = vmatmul.mubr.f32.gmra.mrb[0].mxu0 %v180
        %v275 = vpop.f32.mrb[0].mxu0
        %v276 = vadd.f32 %v203, %v275
        %v277 = vpop.f32.mrb[0].mxu0
        %278 = vmatprep.mubr.f32.mxu0 0.0
        %279 = vmatmul.mubr.f32.gmra.mrb[0].mxu0 %v181
        %v280 = vpop.f32.mrb[0].mxu0
        %v281 = vadd.f32 %v203, %v280
        %v282 = vpop.f32.mrb[0].mxu0
        %283 = vmatprep.mubr.f32.mxu0 0.0
        %284 = vmatmul.mubr.f32.gmra.mrb[0].mxu0 %v182
        %v285 = vpop.f32.mrb[0].mxu0
        %v286 = vadd.f32 %v203, %v285
        %v287 = vpop.f32.mrb[0].mxu0
        %288 = vdwg.mxu0
        %v289 = vtanh.pop %v271
        %v290 = vtanh.pop %v276
        %v291 = vtanh.pop %v281
        %v292 = vtanh.pop %v286
        %v293 = vld [vmem:[#allocation5 + $0x88] sm:$0xff]
        %v294 = vld [vmem:[#allocation5 + $0x90] sm:$0xff]
        %v295 = vld [vmem:[#allocation5 + $0x98] sm:$0xff]
        %v296 = vld [vmem:[#allocation5 + $0xa0] sm:$0xff]
        %v297 = vld [vmem:[#allocation5 + $0xa8] sm:$0xff]
        %v298 = vld [vmem:[#allocation5 + $0xb0] sm:$0xff]
        %v299 = vld [vmem:[#allocation5 + $0xb8] sm:$0xff]
        %v300 = vld [vmem:[#allocation5 + $0xc0] sm:$0xff]
        %v301 = vld [vmem:[#allocation5 + $0xc8] sm:$0xff]
        %v302 = vld [vmem:[#allocation5 + $0xd0] sm:$0xff]
        %v303 = vld [vmem:[#allocation5 + $0xd8] sm:$0xff]
        %v304 = vld [vmem:[#allocation5 + $0xe0] sm:$0xff]
        %v305 = vld [vmem:[#allocation5 + $0xe8] sm:$0xff]
        %v306 = vld [vmem:[#allocation5 + $0xf0] sm:$0xff]
        %v307 = vld [vmem:[#allocation5 + $0xf8] sm:$0xff]
        %v308 = vld [vmem:[#allocation5 + $0x100] sm:$0xff]
        %v309 = vld [vmem:[#allocation5 + $0x108] sm:$0x1]
        %v310 = vlaneseq
        %v311 = vshrl.u32 %v310, 7
        %v312 = vsub.s32 0, %v311
        %v313 = vrot.slane %v309, %v312
        %314 = vmatprep.subr.mxu0 0.0
        %315 = vmatpush1.msra.mxu0 %v293
        %316 = vmatprep.subr.mxu0 0.0
        %317 = vmatpush1.msra.mxu0 %v294
        %318 = vmatprep.subr.mxu0 0.0
        %319 = vmatpush1.msra.mxu0 %v295
        %320 = vmatprep.subr.mxu0 0.0
        %321 = vmatpush1.msra.mxu0 %v296
        %322 = vmatprep.subr.mxu0 0.0
        %323 = vmatpush1.msra.mxu0 %v297
        %324 = vmatprep.subr.mxu0 0.0
        %325 = vmatpush1.msra.mxu0 %v298
        %326 = vmatprep.subr.mxu0 0.0
        %327 = vmatpush1.msra.mxu0 %v299
        %328 = vmatprep.subr.mxu0 0.0
        %329 = vmatpush1.msra.mxu0 %v300
        %330 = vmatprep.subr.mxu0 0.0
        %331 = vmatpush1.msra.mxu0 %v301
        %332 = vmatprep.subr.mxu0 0.0
        %333 = vmatpush1.msra.mxu0 %v302
        %334 = vmatprep.subr.mxu0 0.0
        %335 = vmatpush1.msra.mxu0 %v303
        %336 = vmatprep.subr.mxu0 0.0
        %337 = vmatpush1.msra.mxu0 %v304
        %338 = vmatprep.subr.mxu0 0.0
        %339 = vmatpush1.msra.mxu0 %v305
        %340 = vmatprep.subr.mxu0 0.0
        %341 = vmatpush1.msra.mxu0 %v306
        %342 = vmatprep.subr.mxu0 0.0
        %343 = vmatpush1.msra.mxu0 %v307
        %344 = vmatprep.subr.mxu0 0.0
        %345 = vmatpush1.msra.mxu0 %v308
        %346 = vmatprep.subr.mxu0 0.0
        %347 = vmatpush1.msra.mxu0 0.0
        %348 = vmatprep.subr.mxu0 0.0
        %349 = vmatpush1.msra.mxu0 0.0
        %350 = vmatprep.subr.mxu0 0.0
        %351 = vmatpush1.msra.mxu0 0.0
        %352 = vmatprep.subr.mxu0 0.0
        %353 = vmatpush1.msra.mxu0 0.0
        %354 = vmatprep.subr.mxu0 0.0
        %355 = vmatpush1.msra.mxu0 0.0
        %356 = vmatprep.subr.mxu0 0.0
        %357 = vmatpush1.msra.mxu0 0.0
        %358 = vmatprep.subr.mxu0 0.0
        %359 = vmatpush1.msra.mxu0 0.0
        %360 = vmatprep.subr.mxu0 0.0
        %361 = vmatpush1.msra.mxu0 0.0
        %362 = vmatprep.subr.mxu0 0.0
        %363 = vmatpush1.msra.mxu0 0.0
        %364 = vmatprep.subr.mxu0 0.0
        %365 = vmatpush1.msra.mxu0 0.0
        %366 = vmatprep.subr.mxu0 0.0
        %367 = vmatpush1.msra.mxu0 0.0
        %368 = vmatprep.subr.mxu0 0.0
        %369 = vmatpush1.msra.mxu0 0.0
        %370 = vmatprep.subr.mxu0 0.0
        %371 = vmatpush1.msra.mxu0 0.0
        %372 = vmatprep.subr.mxu0 0.0
        %373 = vmatpush1.msra.mxu0 0.0
        %374 = vmatprep.subr.mxu0 0.0
        %375 = vmatpush1.msra.mxu0 0.0
        %376 = vmatprep.subr.mxu0 0.0
        %377 = vmatpush1.msra.mxu0 0.0
        %378 = vmatprep.mubr.f32.mxu0 0.0
        %379 = vmatmul.mubr.f32.gmra.mrb[0].mxu0 %v289
        %v380 = vpop.f32.mrb[0].mxu0
        %v381 = vadd.f32 %v313, %v380
        %v382 = vpop.f32.mrb[0].mxu0
        %383 = vmatprep.mubr.f32.mxu0 0.0
        %384 = vmatmul.mubr.f32.gmra.mrb[0].mxu0 %v290
        %v385 = vpop.f32.mrb[0].mxu0
        %v386 = vadd.f32 %v313, %v385
        %v387 = vpop.f32.mrb[0].mxu0
        %388 = vmatprep.mubr.f32.mxu0 0.0
        %389 = vmatmul.mubr.f32.gmra.mrb[0].mxu0 %v291
        %v390 = vpop.f32.mrb[0].mxu0
        %v391 = vadd.f32 %v313, %v390
        %v392 = vpop.f32.mrb[0].mxu0
        %393 = vmatprep.mubr.f32.mxu0 0.0
        %394 = vmatmul.mubr.f32.gmra.mrb[0].mxu0 %v292
        %v395 = vpop.f32.mrb[0].mxu0
        %v396 = vadd.f32 %v313, %v395
        %v397 = vpop.f32.mrb[0].mxu0
        %398 = vdwg.mxu0
        %v399 = vtanh.pop %v381
        %v400 = vtanh.pop %v386
        %v401 = vtanh.pop %v391
        %v402 = vtanh.pop %v396
        %v403 = vld [vmem:[#allocation5 + $0x110] sm:$0xff]
        %v404 = vld [vmem:[#allocation5 + $0x118] sm:$0xff]
        %v405 = vld [vmem:[#allocation5 + $0x120] sm:$0xff]
        %v406 = vld [vmem:[#allocation5 + $0x128] sm:$0xff]
        %v407 = vld [vmem:[#allocation5 + $0x130] sm:$0xff]
        %v408 = vld [vmem:[#allocation5 + $0x138] sm:$0xff]
        %v409 = vld [vmem:[#allocation5 + $0x140] sm:$0xff]
        %v410 = vld [vmem:[#allocation5 + $0x148] sm:$0xff]
        %v411 = vld [vmem:[#allocation5 + $0x150] sm:$0xff]
        %v412 = vld [vmem:[#allocation5 + $0x158] sm:$0xff]
        %v413 = vld [vmem:[#allocation5 + $0x160] sm:$0xff]
        %v414 = vld [vmem:[#allocation5 + $0x168] sm:$0xff]
        %v415 = vld [vmem:[#allocation5 + $0x170] sm:$0xff]
        %v416 = vld [vmem:[#allocation5 + $0x178] sm:$0xff]
        %v417 = vld [vmem:[#allocation5 + $0x180] sm:$0xff]
        %v418 = vld [vmem:[#allocation5 + $0x188] sm:$0xff]
        %v419 = vld [vmem:[#allocation5 + $0x190] sm:$0x1]
        %v420 = vlaneseq
        %v421 = vshrl.u32 %v420, 7
        %v422 = vsub.s32 0, %v421
        %v423 = vrot.slane %v419, %v422
        %424 = vmatprep.subr.mxu0 0.0
        %425 = vmatpush1.msra.mxu0 %v403
        %426 = vmatprep.subr.mxu0 0.0
        %427 = vmatpush1.msra.mxu0 %v404
        %428 = vmatprep.subr.mxu0 0.0
        %429 = vmatpush1.msra.mxu0 %v405
        %430 = vmatprep.subr.mxu0 0.0
        %431 = vmatpush1.msra.mxu0 %v406
        %432 = vmatprep.subr.mxu0 0.0
        %433 = vmatpush1.msra.mxu0 %v407
        %434 = vmatprep.subr.mxu0 0.0
        %435 = vmatpush1.msra.mxu0 %v408
        %436 = vmatprep.subr.mxu0 0.0
        %437 = vmatpush1.msra.mxu0 %v409
        %438 = vmatprep.subr.mxu0 0.0
        %439 = vmatpush1.msra.mxu0 %v410
        %440 = vmatprep.subr.mxu0 0.0
        %441 = vmatpush1.msra.mxu0 %v411
        %442 = vmatprep.subr.mxu0 0.0
        %443 = vmatpush1.msra.mxu0 %v412
        %444 = vmatprep.subr.mxu0 0.0
        %445 = vmatpush1.msra.mxu0 %v413
        %446 = vmatprep.subr.mxu0 0.0
        %447 = vmatpush1.msra.mxu0 %v414
        %448 = vmatprep.subr.mxu0 0.0
        %449 = vmatpush1.msra.mxu0 %v415
        %450 = vmatprep.subr.mxu0 0.0
        %451 = vmatpush1.msra.mxu0 %v416
        %452 = vmatprep.subr.mxu0 0.0
        %453 = vmatpush1.msra.mxu0 %v417
        %454 = vmatprep.subr.mxu0 0.0
        %455 = vmatpush1.msra.mxu0 %v418
        %456 = vmatprep.subr.mxu0 0.0
        %457 = vmatpush1.msra.mxu0 0.0
        %458 = vmatprep.subr.mxu0 0.0
        %459 = vmatpush1.msra.mxu0 0.0
        %460 = vmatprep.subr.mxu0 0.0
        %461 = vmatpush1.msra.mxu0 0.0
        %462 = vmatprep.subr.mxu0 0.0
        %463 = vmatpush1.msra.mxu0 0.0
        %464 = vmatprep.subr.mxu0 0.0
        %465 = vmatpush1.msra.mxu0 0.0
        %466 = vmatprep.subr.mxu0 0.0
        %467 = vmatpush1.msra.mxu0 0.0
        %468 = vmatprep.subr.mxu0 0.0
        %469 = vmatpush1.msra.mxu0 0.0
        %470 = vmatprep.subr.mxu0 0.0
        %471 = vmatpush1.msra.mxu0 0.0
        %472 = vmatprep.subr.mxu0 0.0
        %473 = vmatpush1.msra.mxu0 0.0
        %474 = vmatprep.subr.mxu0 0.0
        %475 = vmatpush1.msra.mxu0 0.0
        %476 = vmatprep.subr.mxu0 0.0
        %477 = vmatpush1.msra.mxu0 0.0
        %478 = vmatprep.subr.mxu0 0.0
        %479 = vmatpush1.msra.mxu0 0.0
        %480 = vmatprep.subr.mxu0 0.0
        %481 = vmatpush1.msra.mxu0 0.0
        %482 = vmatprep.subr.mxu0 0.0
        %483 = vmatpush1.msra.mxu0 0.0
        %484 = vmatprep.subr.mxu0 0.0
        %485 = vmatpush1.msra.mxu0 0.0
        %486 = vmatprep.subr.mxu0 0.0
        %487 = vmatpush1.msra.mxu0 0.0
        %488 = vmatprep.mubr.f32.mxu0 0.0
        %489 = vmatmul.mubr.f32.gmra.mrb[0].mxu0 %v399
        %v490 = vpop.f32.mrb[0].mxu0
        %v491 = vadd.f32 %v423, %v490
        %v492 = vpop.f32.mrb[0].mxu0
        %493 = vmatprep.mubr.f32.mxu0 0.0
        %494 = vmatmul.mubr.f32.gmra.mrb[0].mxu0 %v400
        %v495 = vpop.f32.mrb[0].mxu0
        %v496 = vadd.f32 %v423, %v495
        %v497 = vpop.f32.mrb[0].mxu0
        %498 = vmatprep.mubr.f32.mxu0 0.0
        %499 = vmatmul.mubr.f32.gmra.mrb[0].mxu0 %v401
        %v500 = vpop.f32.mrb[0].mxu0
        %v501 = vadd.f32 %v423, %v500
        %v502 = vpop.f32.mrb[0].mxu0
        %503 = vmatprep.mubr.f32.mxu0 0.0
        %504 = vmatmul.mubr.f32.gmra.mrb[0].mxu0 %v402
        %v505 = vpop.f32.mrb[0].mxu0
        %v506 = vadd.f32 %v423, %v505
        %v507 = vpop.f32.mrb[0].mxu0
        %508 = vdwg.mxu0
        %509 = vst [vmem:[%s176] sm:$0xff] %v491
        %510 = vst [vmem:[%s176 + $0x8] sm:$0xff] %v496
        %511 = vst [vmem:[%s176 + $0x10] sm:$0xff] %v501
        %512 = vst [vmem:[%s176 + $0x18] sm:$0xff] %v506
        %s513 = sand.u32 %s75, 1
        %s514 = scalar_lea.sflag [#allocation4], %s513
        %s515 = sand.u32 %s75, 1
        %s516 = smul.addr %s515, 32
        %s517 = scalar_lea.vmem [#allocation7], %s516
        // Predicated region
        $region37: #{tpu_custom_call.1} parent=27 // pred_check
          %p518 = pneg %p85
        $region38: #{tpu_custom_call.1} parent=27 // pred_check_branch
          %520 = sbr.rel (%p518) target = $region40
        $region39: #{tpu_custom_call.1} parent=27 // pred_region
          %s521 = smul.u32 4, %s20
          %s523 = ssub.s32 512, 512
          %524 = vsyncadd %s514, %s523
          %s525 = smul.addr %s521, 128
          %s526 = scalar_lea.hbm %s2, %s525
          %s527 = sshll.u32 %s517, 4
          %s528 = int_to_ptr.vmem [resolvable:$true] %s527
          %533 = dma.vmem_to_hbm [thread:$0]  %s528, 512, %s526, %s514, 128, 128, 8
        $region40: #{tpu_custom_call.1} parent=27 // pred_fallthru
          _
      $region28: #{tpu_custom_call.1} parent=5 // pred_fallthru
        _
      %p534 = scmp.le.s32.totalorder 2, %s15
      // Predicated region
      $region41: #{tpu_custom_call.1} parent=5 // pred_check
        %p535 = pneg %p534
      $region42: #{tpu_custom_call.1} parent=5 // pred_check_branch
        %537 = sbr.rel (%p535) target = $region44
      $region43: #{tpu_custom_call.1} parent=5 // pred_region
        %s538 = ssub.s32 %s15, 2
        // Predicated region
        $region45: #{tpu_custom_call.1} parent=43 // pred_check
          %p539 = pneg %p91
        $region46: #{tpu_custom_call.1} parent=43 // pred_check_branch
          %541 = sbr.rel (%p539) target = $region48
        $region47: #{tpu_custom_call.1} parent=43 // pred_region
          %s542 = sand.u32 %s76, 1
          %s543 = scalar_lea.sflag [#allocation4], %s542
          %s544 = sand.u32 %s76, 1
          %s545 = smul.addr %s544, 32
          %s546 = scalar_lea.vmem [#allocation7], %s545
          %547 = dma.done %s543, 512
        $region48: #{tpu_custom_call.1} parent=43 // pred_fallthru
          _
      $region44: #{tpu_custom_call.1} parent=5 // pred_fallthru
        _
    $region6: #{tpu_custom_call.1} parent=1 // loop_footer
      %s19 = sadd.s32 1, %s15
    $region7: #{tpu_custom_call.1} parent=1 // loop_footer_branch
      %14 = sbr.rel target = $region3
    $region8: #{tpu_custom_call.1} parent=1 // loop_exit
      _
    %548 = vsyncpa [#allocation3], 1
    %s549 = scalar_lea.sflag [#allocation3], 1
    %550 = vsyncpa %s549, 1
    %551 = vsyncpa [#allocation6], 1
    %552 = vsyncpa [#allocation4], 1
    %s553 = scalar_lea.sflag [#allocation4], 1
    %554 = vsyncpa %s553, 1

</llo_original>
